<compile_context>
chip_gen: v5e
topology: v5e:2x2
jax: 0.10.0
libtpu: 0.0.40
codegen_flags: <defaults>
</compile_context>

<pallas_src>
import functools

import jax
import jax.numpy as jnp
from jax.experimental import pallas as pl
from jax.experimental.pallas import tpu as pltpu


def _toyreg_kernel(params_ref, x_ref, o_ref):
    # params_ref: SMEM (3,) f32  -- [w_sq, w_lin, c] with c = w_one + bias
    # x_ref:      VMEM (tile_rows, lanes) f32
    # o_ref:      VMEM (tile_rows, lanes) f32
    x = x_ref[...]
    w_sq = params_ref[0]
    w_lin = params_ref[1]
    c = params_ref[2]
    # Horner form of w_sq*x^2 + w_lin*x + c (2 mul + 2 add per element, VPU).
    o_ref[...] = x * (x * w_sq + w_lin) + c


def _choose_tile_rows(rows, *, max_tile_rows, target_steps):
    """Pick a sublane-aligned row tile that yields >= target_steps grid steps."""
    if rows <= 8:
        # Tiny input: a single block equal to the full array (always legal).
        return rows
    tile = pl.cdiv(rows, target_steps)          # aim for >= target_steps steps
    tile = max(8, pl.cdiv(tile, 8) * 8)         # sublane (8) multiple
    return min(tile, max_tile_rows)


@functools.partial(
    jax.jit, static_argnames=("lanes", "max_tile_rows", "target_steps")
)
def student_toydata_regsq(x, weight, bias, *, lanes=512, max_tile_rows=2048,
                          target_steps=8):
    """x: (N, 1) f32, weight: (1, 3) f32, bias: (1,) f32 -> (N, 1) f32."""
    n = x.shape[0]

    # Fold the constant term once in the wrapper (scalar work, outside kernel).
    w_sq = weight[0, 0]
    w_lin = weight[0, 1]
    c = weight[0, 2] + bias[0]
    params = jnp.stack([w_sq, w_lin, c]).astype(jnp.float32)

    # --- Layout plumbing: lane-dense 2-D slab --------------------------------
    x_flat = x.reshape(-1).astype(jnp.float32)

    if n % lanes == 0:
        # Fast path: pure metadata reshape — no pad, no tail slice.
        padded_n = n
        x2d = x_flat.reshape(n // lanes, lanes)
    else:
        # Ragged N: pad only up to an (8*lanes) boundary (<= 4095 elements).
        # The final partial grid block (if any) has its OOB writes masked by
        # Pallas, which is safe for this pure elementwise op.
        chunk = 8 * lanes
        padded_n = pl.cdiv(n, chunk) * chunk
        x2d = jnp.pad(x_flat, (0, padded_n - n)).reshape(padded_n // lanes, lanes)

    rows = x2d.shape[0]
    tile_rows = _choose_tile_rows(
        rows, max_tile_rows=max_tile_rows, target_steps=target_steps
    )
    grid = (pl.cdiv(rows, tile_rows),)

    out2d = pl.pallas_call(
        _toyreg_kernel,
        out_shape=jax.ShapeDtypeStruct((rows, lanes), jnp.float32),
        grid=grid,
        in_specs=[
            pl.BlockSpec(memory_space=pltpu.MemorySpace.SMEM),      # params (3,)
            pl.BlockSpec((tile_rows, lanes), lambda i: (i, 0)),     # x tile
        ],
        out_specs=pl.BlockSpec((tile_rows, lanes), lambda i: (i, 0)),
        compiler_params=pltpu.CompilerParams(
            # TODO(synk): on v7x, verify in xprof that "parallel" shards this
            # axis across both TensorCores; switch to pltpu.CORE_PARALLEL if not.
            dimension_semantics=("parallel",),
            # 4 double-buffered 4 MiB blocks (in+out) fit easily; raise the
            # scoped limit so v5e's 16 MiB default doesn't reject the tiling.
            vmem_limit_bytes=48 * 1024 * 1024,
        ),
    )(params, x2d)

    out_flat = out2d.reshape(padded_n)
    if padded_n != n:
        out_flat = out_flat[:n]
    return out_flat.reshape(n, 1)


def reference(x, weight, bias):
    features = jnp.concatenate([x ** 2, x, jnp.ones_like(x)], axis=1)  # (N, 3)
    return features @ weight.T + bias  # (N, 1)


if __name__ == "__main__":
    key = jax.random.PRNGKey(0)
    kx, kw, kb, kx2, kx3 = jax.random.split(key, 5)

    # Deterministic parameter init mimicking nn.Linear(3, 1) default
    # (uniform in [-1/sqrt(fan_in), 1/sqrt(fan_in)]).
    bound = 1.0 / jnp.sqrt(3.0)
    weight = jax.random.uniform(kw, (1, 3), jnp.float32, -bound, bound)
    bias = jax.random.uniform(kb, (1,), jnp.float32, -bound, bound)

    # Small batch of scalar inputs, shape (N, 1) as the forward implies
    # (ragged path: N not a multiple of lanes).
    x = jax.random.normal(kx, (8, 1), jnp.float32)
    out = jax.block_until_ready(student_toydata_regsq(x, weight, bias))
    ref = reference(x, weight, bias)
    assert out.shape == (8, 1)
    assert jnp.allclose(out, ref, atol=1e-5, rtol=1e-5)

    # Non-multiple-of-lanes batch: exercises the small pad + tail slice.
    x_big = jax.random.normal(kx2, (1000, 1), jnp.float32)
    out_big = jax.block_until_ready(student_toydata_regsq(x_big, weight, bias))
    ref_big = reference(x_big, weight, bias)
    assert out_big.shape == (1000, 1)
    assert jnp.allclose(out_big, ref_big, atol=1e-5, rtol=1e-5)

    # Lane-aligned batch: zero-copy fast path with a multi-step grid.
    x_al = jax.random.normal(kx3, (8192, 1), jnp.float32)
    out_al = jax.block_until_ready(student_toydata_regsq(x_al, weight, bias))
    ref_al = reference(x_al, weight, bias)
    assert out_al.shape == (8192, 1)
    assert jnp.allclose(out_al, ref_al, atol=1e-5, rtol=1e-5)

    print("KERNEL_OK")
</pallas_src>

<mosaic_0001>
module attributes {stable_mosaic.version = 11 : i64} {
  func.func @_toyreg_kernel(%arg0: i32, %arg1: memref<3xf32, #tpu.memory_space<smem>>, %arg2: memref<8x512xf32, #tpu.memory_space<vmem>>, %arg3: memref<8x512xf32, #tpu.memory_space<vmem>>) attributes {dimension_semantics = [#tpu.dimension_semantics<parallel>], iteration_bounds = array<i64: 1>, scalar_prefetch = 0 : i64, scratch_operands = 0 : i64, tpu.core_type = #tpu.core_type<tc>, window_params = [{transform_indices = @transform_0, window_bounds = array<i64: 3>}, {transform_indices = @transform_1, window_bounds = array<i64: 8, 512>}, {transform_indices = @transform_2, window_bounds = array<i64: 8, 512>}]} {
    %c0 = arith.constant 0 : index
    %c0_0 = arith.constant 0 : index
    %0 = vector.load %arg2[%c0, %c0_0] : memref<8x512xf32, #tpu.memory_space<vmem>>, vector<8x512xf32>
    %c0_1 = arith.constant 0 : index
    %1 = memref.load %arg1[%c0_1] : memref<3xf32, #tpu.memory_space<smem>>
    %c1 = arith.constant 1 : index
    %2 = memref.load %arg1[%c1] : memref<3xf32, #tpu.memory_space<smem>>
    %c2 = arith.constant 2 : index
    %3 = memref.load %arg1[%c2] : memref<3xf32, #tpu.memory_space<smem>>
    %4 = vector.broadcast %1 : f32 to vector<8x512xf32>
    %5 = arith.mulf %0, %4 : vector<8x512xf32>
    %6 = vector.broadcast %2 : f32 to vector<8x512xf32>
    %7 = arith.addf %5, %6 : vector<8x512xf32>
    %8 = arith.mulf %0, %7 : vector<8x512xf32>
    %9 = vector.broadcast %3 : f32 to vector<8x512xf32>
    %10 = arith.addf %8, %9 : vector<8x512xf32>
    %c0_2 = arith.constant 0 : index
    %c0_3 = arith.constant 0 : index
    %11 = vector.load %arg3[%c0_2, %c0_3] : memref<8x512xf32, #tpu.memory_space<vmem>>, vector<8x512xf32>
    tpu.vector_store %arg3[%c0_2, %c0_3], %10 {strides = array<i32>} : memref<8x512xf32, #tpu.memory_space<vmem>>, vector<8x512xf32>,
    return
  }
  func.func @transform_0(%arg0: i32) -> i32 {
    %c0_i32 = arith.constant 0 : i32
    %c0_i32_0 = arith.constant 0 : i32
    return %c0_i32 : i32
  }
  func.func @transform_1(%arg0: i32) -> (i32, i32) {
    %c0_i32 = arith.constant 0 : i32
    %c0_i32_0 = arith.constant 0 : i32
    return %arg0, %c0_i32 : i32, i32
  }
  func.func @transform_2(%arg0: i32) -> (i32, i32) {
    %c0_i32 = arith.constant 0 : i32
    %c0_i32_0 = arith.constant 0 : i32
    return %arg0, %c0_i32 : i32, i32
  }
}

</mosaic_0001>

<llo_original>
// kernel: student_toydata_regsq.1
$region0: #{student_toydata_regsq.1}
  #allocation0 [shape = 'u32[]', space=smem, size = 0x4, offset = 0x4, fixed_abs, tag = 'smem constant byte address 0x4 - core index']
  #allocation1 [shape = 'u32[72,128]{1,0:T(1,128)}', space=vmem, size = 0x9000, scoped, tag = 'internal scratch']
  %s0 = inlined_call_operand.vmem [shape: f32[3], index: 0, kind: input, shape index: {}]
  %s1 = inlined_call_operand.vmem [shape: f32[8,512], index: 1, kind: input, shape index: {}]
  %s2 = inlined_call_operand.vmem [shape: f32[8,512], index: 2, kind: output, shape index: {}]
  %s3 = sld [smem:[#allocation0]]
  $region22: #{student_toydata_regsq.1} parent=0
    _
  %s5 = ssub.s32 1, %s3
  %s6 = scalar_select 0, %s5, %s3
  $region1: #{student_toydata_regsq.1} parent=0
    #allocation2 [shape = 'u8[512]{0}', space=smem, size = 0x200, scoped, tag = 'input window, operand 0, single buffered']
    #allocation3 [shape = 's32[1]{0}', space=sflag, size = 0x4, scoped, tag = 'scoped memory for student_toydata_regsq.1']
    %7 = vsyncpa [#allocation3], 0
    // Predicated region
    $region2: #{student_toydata_regsq.1} parent=1 // pred_check
      _
    $region3: #{student_toydata_regsq.1} parent=1 // pred_check_branch
      %9 = sbr.rel (0) target = $region5
    $region4: #{student_toydata_regsq.1} parent=1 // pred_region
      %11 = vsyncadd [#allocation3], 0
      %s13 = sshll.u32 %s0, 4
      %s14 = int_to_ptr.vmem [resolvable:$true] %s13
      %16 = dma.vmem_to_smem %s14, 16, [#allocation2], [#allocation3]
    $region5: #{student_toydata_regsq.1} parent=1 // pred_fallthru
      _
    // Predicated region
    $region6: #{student_toydata_regsq.1} parent=1 // pred_check
      _
    $region7: #{student_toydata_regsq.1} parent=1 // pred_check_branch
      %18 = sbr.rel (0) target = $region9
    $region8: #{student_toydata_regsq.1} parent=1 // pred_region
      _
    $region9: #{student_toydata_regsq.1} parent=1 // pred_fallthru
      _
    // Predicated region
    $region10: #{student_toydata_regsq.1} parent=1 // pred_check
      _
    $region11: #{student_toydata_regsq.1} parent=1 // pred_check_branch
      %20 = sbr.rel (0) target = $region13
    $region12: #{student_toydata_regsq.1} parent=1 // pred_region
      %22 = dma.done [#allocation3], 16
    $region13: #{student_toydata_regsq.1} parent=1 // pred_fallthru
      _
    %23 = sfence
    %v24 = vld [vmem:[%s1] sm:$0xff]
    %v25 = vld [vmem:[%s1 + $0x8] sm:$0xff]
    %v26 = vld [vmem:[%s1 + $0x10] sm:$0xff]
    %v27 = vld [vmem:[%s1 + $0x18] sm:$0xff]
    %s28 = sld [smem:[#allocation2]]
    %s29 = sld [smem:[#allocation2 + $0x1]]
    %s30 = sld [smem:[#allocation2 + $0x2]]
    %v31 = vstv %s28
    %v32 = vmul.f32 %v24, %v31
    %v33 = vmul.f32 %v25, %v31
    %v34 = vmul.f32 %v26, %v31
    %v35 = vmul.f32 %v27, %v31
    %v36 = vstv %s29
    %v37 = vadd.f32 %v32, %v36
    %v38 = vadd.f32 %v33, %v36
    %v39 = vadd.f32 %v34, %v36
    %v40 = vadd.f32 %v35, %v36
    %v41 = vmul.f32 %v24, %v37
    %v42 = vmul.f32 %v25, %v38
    %v43 = vmul.f32 %v26, %v39
    %v44 = vmul.f32 %v27, %v40
    %v45 = vstv %s30
    %v46 = vadd.f32 %v41, %v45
    %v47 = vadd.f32 %v42, %v45
    %v48 = vadd.f32 %v43, %v45
    %v49 = vadd.f32 %v44, %v45
    %50 = vst [vmem:[%s2] sm:$0xff] %v46
    %51 = vst [vmem:[%s2 + $0x8] sm:$0xff] %v47
    %52 = vst [vmem:[%s2 + $0x10] sm:$0xff] %v48
    %53 = vst [vmem:[%s2 + $0x18] sm:$0xff] %v49
    // Predicated region
    $region14: #{student_toydata_regsq.1} parent=1 // pred_check
      _
    $region15: #{student_toydata_regsq.1} parent=1 // pred_check_branch
      %55 = sbr.rel (0) target = $region17
    $region16: #{student_toydata_regsq.1} parent=1 // pred_region
      _
    $region17: #{student_toydata_regsq.1} parent=1 // pred_fallthru
      _
    // Predicated region
    $region18: #{student_toydata_regsq.1} parent=1 // pred_check
      _
    $region19: #{student_toydata_regsq.1} parent=1 // pred_check_branch
      %57 = sbr.rel (0) target = $region21
    $region20: #{student_toydata_regsq.1} parent=1 // pred_region
      _
    $region21: #{student_toydata_regsq.1} parent=1 // pred_fallthru
      _
    %58 = vsyncpa [#allocation3], 1

</llo_original>
